<compile_context>
chip_gen: v5e
topology: v5e:2x2
jax: 0.10.0
libtpu: 0.0.40
codegen_flags: <defaults>
</compile_context>

<pallas_src>
import math

import jax
import jax.numpy as jnp
from jax.experimental import pallas as pl
from jax.experimental.pallas import tpu as pltpu


def saxpy_kernel(x_ref, w_ref, b_ref, o_ref):
    # x_ref/o_ref: (row_tile, lane_tile); w_ref/b_ref: (1, lane_tile).
    # Pure VPU mul+add; the kernel is HBM-bound so this is free filler.
    o_ref[...] = w_ref[...] * x_ref[...] + b_ref[...]


def _round_down_multiple(x, m):
    return (x // m) * m


def _choose_tiles(n_rows, n_lanes, itemsize):
    """Pick (row_tile, lane_tile).

    Goals: lane-dense last dim (multiple of 128 or full extent), tiles large
    enough to amortize the per-grid-step overhead, but small enough that
    double-buffered x-in + y-out tiles (4 * tile_bytes) plus the resident
    weight/bias row fit within the most conservative scoped-VMEM defaults
    (v5e: 16 MiB scoped).
    """
    max_tile_bytes = 2 * 1024 * 1024  # per streamed tile -> ~8 MiB in flight

    # Lane tile: full extent when it fits (always a legal block), otherwise a
    # multiple of 128 so stores are unmasked, lane-dense vst.
    if n_lanes * itemsize <= max_tile_bytes or n_lanes < 128:
        lane_tile = n_lanes
    else:
        lane_tile = min(
            _round_down_multiple(n_lanes, 128),
            max(128, _round_down_multiple(max_tile_bytes // itemsize, 128)),
        )

    # Row tile: fill the remaining per-tile budget; multiple of 8 sublanes or
    # the full row extent when the batch is small.
    rows_budget = max(1, max_tile_bytes // max(1, lane_tile * itemsize))
    if rows_budget >= n_rows:
        row_tile = n_rows
    else:
        row_tile = max(8, _round_down_multiple(rows_budget, 8))
    return row_tile, lane_tile


def saxpy(x, weight, bias):
    """y = weight * x + bias, with weight/bias of shape x.shape[1:] broadcast
    over the leading batch dim (same semantics as the PyTorch module)."""
    orig_shape = x.shape
    B = x.shape[0]
    param_shape = x.shape[1:]
    assert weight.shape == param_shape and bias.shape == param_shape

    L = math.prod(param_shape)
    x2 = x.reshape(B, L)
    w2 = weight.reshape(1, L)
    b2 = bias.reshape(1, L)

    itemsize = jnp.dtype(x.dtype).itemsize
    row_tile, lane_tile = _choose_tiles(B, L, itemsize)
    n_row = pl.cdiv(B, row_tile)
    n_lane = pl.cdiv(L, lane_tile)

    out2 = pl.pallas_call(
        saxpy_kernel,
        out_shape=jax.ShapeDtypeStruct((B, L), x.dtype),
        # Rows (batch) innermost: weight/bias blocks are indexed only by the
        # lane-tile axis, so they stay resident in VMEM across the batch loop.
        grid=(n_lane, n_row),
        in_specs=[
            pl.BlockSpec((row_tile, lane_tile), lambda j, i: (i, j)),
            pl.BlockSpec((1, lane_tile), lambda j, i: (0, j)),
            pl.BlockSpec((1, lane_tile), lambda j, i: (0, j)),
        ],
        out_specs=pl.BlockSpec((row_tile, lane_tile), lambda j, i: (i, j)),
        compiler_params=pltpu.CompilerParams(
            dimension_semantics=("parallel", "arbitrary"),
        ),
    )(x2, w2, b2)

    return out2.reshape(orig_shape)


if __name__ == "__main__":
    key = jax.random.PRNGKey(0)
    k_x, k_w, k_b = jax.random.split(key, 3)

    # Module: Saxpy(shape=(C, H, W), stdev=0.1)
    B, C, H, W = 2, 4, 16, 16
    stdev = 0.1
    shape = (C, H, W)

    # Deterministic parameter init mirroring __init__:
    #   weight = 1 + stdev * randn(shape); bias = stdev * randn(shape)
    weight = 1.0 + stdev * jax.random.normal(k_w, shape, dtype=jnp.float32)
    bias = stdev * jax.random.normal(k_b, shape, dtype=jnp.float32)

    x = jax.random.normal(k_x, (B, C, H, W), dtype=jnp.float32)

    y = saxpy(x, weight, bias)
    y = jax.block_until_ready(y)

    # Reference check (pure JAX, same broadcasting semantics as PyTorch).
    y_ref = weight * x + bias
    assert y.shape == (B, C, H, W)
    assert jnp.allclose(y, y_ref, atol=1e-6, rtol=1e-6)

    print("KERNEL_OK")
</pallas_src>

<mosaic_0001>
module attributes {stable_mosaic.version = 11 : i64} {
  func.func @saxpy_kernel(%arg0: i32, %arg1: i32, %arg2: memref<2x1024xf32, #tpu.memory_space<vmem>>, %arg3: memref<1x1024xf32, #tpu.memory_space<vmem>>, %arg4: memref<1x1024xf32, #tpu.memory_space<vmem>>, %arg5: memref<2x1024xf32, #tpu.memory_space<vmem>>) attributes {dimension_semantics = [#tpu.dimension_semantics<parallel>, #tpu.dimension_semantics<arbitrary>], iteration_bounds = array<i64: 1, 1>, scalar_prefetch = 0 : i64, scratch_operands = 0 : i64, tpu.core_type = #tpu.core_type<tc>, window_params = [{transform_indices = @transform_0, window_bounds = array<i64: 2, 1024>}, {transform_indices = @transform_1, window_bounds = array<i64: 1, 1024>}, {transform_indices = @transform_2, window_bounds = array<i64: 1, 1024>}, {transform_indices = @transform_3, window_bounds = array<i64: 2, 1024>}]} {
    %c0 = arith.constant 0 : index
    %c0_0 = arith.constant 0 : index
    %0 = vector.load %arg3[%c0, %c0_0] : memref<1x1024xf32, #tpu.memory_space<vmem>>, vector<1x1024xf32>
    %c0_1 = arith.constant 0 : index
    %c0_2 = arith.constant 0 : index
    %1 = vector.load %arg2[%c0_1, %c0_2] : memref<2x1024xf32, #tpu.memory_space<vmem>>, vector<2x1024xf32>
    %2 = vector.broadcast %0 : vector<1x1024xf32> to vector<2x1024xf32>
    %3 = arith.mulf %2, %1 : vector<2x1024xf32>
    %c0_3 = arith.constant 0 : index
    %c0_4 = arith.constant 0 : index
    %4 = vector.load %arg4[%c0_3, %c0_4] : memref<1x1024xf32, #tpu.memory_space<vmem>>, vector<1x1024xf32>
    %5 = vector.broadcast %4 : vector<1x1024xf32> to vector<2x1024xf32>
    %6 = arith.addf %3, %5 : vector<2x1024xf32>
    %c0_5 = arith.constant 0 : index
    %c0_6 = arith.constant 0 : index
    %7 = vector.load %arg5[%c0_5, %c0_6] : memref<2x1024xf32, #tpu.memory_space<vmem>>, vector<2x1024xf32>
    tpu.vector_store %arg5[%c0_5, %c0_6], %6 {strides = array<i32>} : memref<2x1024xf32, #tpu.memory_space<vmem>>, vector<2x1024xf32>,
    return
  }
  func.func @transform_0(%arg0: i32, %arg1: i32) -> (i32, i32) {
    %c0_i32 = arith.constant 0 : i32
    return %arg1, %arg0 : i32, i32
  }
  func.func @transform_1(%arg0: i32, %arg1: i32) -> (i32, i32) {
    %c0_i32 = arith.constant 0 : i32
    %c0_i32_0 = arith.constant 0 : i32
    return %c0_i32, %arg0 : i32, i32
  }
  func.func @transform_2(%arg0: i32, %arg1: i32) -> (i32, i32) {
    %c0_i32 = arith.constant 0 : i32
    %c0_i32_0 = arith.constant 0 : i32
    return %c0_i32, %arg0 : i32, i32
  }
  func.func @transform_3(%arg0: i32, %arg1: i32) -> (i32, i32) {
    %c0_i32 = arith.constant 0 : i32
    return %arg1, %arg0 : i32, i32
  }
}

</mosaic_0001>

<llo_original>
// kernel: tpu_custom_call.1
$region0: #{tpu_custom_call.1}
  #allocation0 [shape = 'u32[]', space=smem, size = 0x4, offset = 0x4, fixed_abs, tag = 'smem constant byte address 0x4 - core index']
  #allocation1 [shape = 'u32[72,128]{1,0:T(1,128)}', space=vmem, size = 0x9000, scoped, tag = 'internal scratch']
  %s0 = inlined_call_operand.hbm [shape: f32[2,1024], index: 0, kind: input, shape index: {}]
  %s1 = inlined_call_operand.hbm [shape: f32[1,1024], index: 1, kind: input, shape index: {}]
  %s2 = inlined_call_operand.hbm [shape: f32[1,1024], index: 2, kind: input, shape index: {}]
  %s3 = inlined_call_operand.hbm [shape: f32[2,1024], index: 3, kind: output, shape index: {}]
  %s4 = sld [smem:[#allocation0]]
  $region34: #{tpu_custom_call.1} parent=0
    _
  %s6 = ssub.s32 1, %s4
  %s7 = scalar_select 0, %s6, %s4
  $region1: #{tpu_custom_call.1} parent=0
    #allocation2 [shape = 'u8[8192]{0}', space=vmem, size = 0x2000, scoped, tag = 'input window, operand 0, single buffered']
    #allocation3 [shape = 's32[1]{0}', space=sflag, size = 0x4, scoped, tag = 'scoped memory for tpu_custom_call.1']
    #allocation4 [shape = 's32[1]{0}', space=sflag, size = 0x4, scoped, tag = 'scoped memory for tpu_custom_call.1']
    #allocation5 [shape = 'u8[4096]{0}', space=vmem, size = 0x1000, scoped, tag = 'input window, operand 1, single buffered']
    #allocation6 [shape = 's32[1]{0}', space=sflag, size = 0x4, scoped, tag = 'scoped memory for tpu_custom_call.1']
    #allocation7 [shape = 'u8[4096]{0}', space=vmem, size = 0x1000, scoped, tag = 'input window, operand 2, single buffered']
    #allocation8 [shape = 'u8[8192]{0}', space=vmem, size = 0x2000, scoped, tag = 'output window, operand 0, single buffered']
    %8 = vsyncpa [#allocation3], 0
    %9 = vsyncpa [#allocation6], 0
    %10 = vsyncpa [#allocation4], 0
    // Predicated region
    $region2: #{tpu_custom_call.1} parent=1 // pred_check
      _
    $region3: #{tpu_custom_call.1} parent=1 // pred_check_branch
      %12 = sbr.rel (0) target = $region5
    $region4: #{tpu_custom_call.1} parent=1 // pred_region
      %14 = vsyncadd [#allocation3], 0
      %s16 = sshll.u32 %s0, 4
      %s17 = int_to_ptr.hbm [resolvable:$true] %s16
      %s18 = sshll.u32 [#allocation2], 4
      %s19 = int_to_ptr.vmem [resolvable:$true] %s18
      %21 = dma.hbm_to_vmem [thread:$0]  %s17, 256, %s19, [#allocation3]
    $region5: #{tpu_custom_call.1} parent=1 // pred_fallthru
      _
    // Predicated region
    $region6: #{tpu_custom_call.1} parent=1 // pred_check
      _
    $region7: #{tpu_custom_call.1} parent=1 // pred_check_branch
      %23 = sbr.rel (0) target = $region9
    $region8: #{tpu_custom_call.1} parent=1 // pred_region
      %25 = vsyncadd [#allocation6], 0
      %s27 = sshll.u32 %s1, 4
      %s28 = int_to_ptr.hbm [resolvable:$true] %s27
      %s29 = sshll.u32 [#allocation5], 4
      %s30 = int_to_ptr.vmem [resolvable:$true] %s29
      %32 = dma.hbm_to_vmem [thread:$0]  %s28, 128, %s30, [#allocation6]
    $region9: #{tpu_custom_call.1} parent=1 // pred_fallthru
      _
    // Predicated region
    $region10: #{tpu_custom_call.1} parent=1 // pred_check
      _
    $region11: #{tpu_custom_call.1} parent=1 // pred_check_branch
      %34 = sbr.rel (0) target = $region13
    $region12: #{tpu_custom_call.1} parent=1 // pred_region
      %36 = vsyncadd [#allocation6], 0
      %s38 = sshll.u32 %s2, 4
      %s39 = int_to_ptr.hbm [resolvable:$true] %s38
      %s40 = sshll.u32 [#allocation7], 4
      %s41 = int_to_ptr.vmem [resolvable:$true] %s40
      %43 = dma.hbm_to_vmem [thread:$0]  %s39, 128, %s41, [#allocation6]
    $region13: #{tpu_custom_call.1} parent=1 // pred_fallthru
      _
    // Predicated region
    $region14: #{tpu_custom_call.1} parent=1 // pred_check
      _
    $region15: #{tpu_custom_call.1} parent=1 // pred_check_branch
      %45 = sbr.rel (0) target = $region17
    $region16: #{tpu_custom_call.1} parent=1 // pred_region
      %47 = dma.done [#allocation3], 256
    $region17: #{tpu_custom_call.1} parent=1 // pred_fallthru
      _
    // Predicated region
    $region18: #{tpu_custom_call.1} parent=1 // pred_check
      _
    $region19: #{tpu_custom_call.1} parent=1 // pred_check_branch
      %49 = sbr.rel (0) target = $region21
    $region20: #{tpu_custom_call.1} parent=1 // pred_region
      %51 = dma.done [#allocation6], 128
    $region21: #{tpu_custom_call.1} parent=1 // pred_fallthru
      _
    // Predicated region
    $region22: #{tpu_custom_call.1} parent=1 // pred_check
      _
    $region23: #{tpu_custom_call.1} parent=1 // pred_check_branch
      %53 = sbr.rel (0) target = $region25
    $region24: #{tpu_custom_call.1} parent=1 // pred_region
      %55 = dma.done [#allocation6], 128
    $region25: #{tpu_custom_call.1} parent=1 // pred_fallthru
      _
    %v56 = vld [vmem:[#allocation5] sm:$0xff]
    %v57 = vld [vmem:[#allocation2] sm:$0xff]
    %v58 = vld [vmem:[#allocation2 + $0x8] sm:$0xff]
    %v60 = vperm.slane %v56, 0
    %v61 = vperm.slane %v56, 1
    %v62 = vperm.slane %v56, 2
    %v63 = vperm.slane %v56, 3
    %v64 = vperm.slane %v56, 4
    %v65 = vperm.slane %v56, 5
    %v66 = vperm.slane %v56, 6
    %v67 = vperm.slane %v56, 7
    %78 = vst [vmem:[#allocation1] ss:$4 sm:$0xff] %v57
    %s79 = scalar_lea.vmem [#allocation1], 32
    %80 = vst [vmem:[%s79] ss:$4 sm:$0xff] %v58
    %v81 = vld.sshfl [vmem:[#allocation1] sm:$0xff pattern:$0x73625140]
    %v82 = vld.sshfl [vmem:[#allocation1 + $0x8] sm:$0xff pattern:$0x73625140]
    %v83 = vld.sshfl [vmem:[#allocation1 + $0x10] sm:$0xff pattern:$0x73625140]
    %v84 = vld.sshfl [vmem:[#allocation1 + $0x18] sm:$0xff pattern:$0x73625140]
    %v85 = vld.sshfl [vmem:[#allocation1 + $0x20] sm:$0xff pattern:$0x73625140]
    %v86 = vld.sshfl [vmem:[#allocation1 + $0x28] sm:$0xff pattern:$0x73625140]
    %v87 = vld.sshfl [vmem:[#allocation1 + $0x30] sm:$0xff pattern:$0x73625140]
    %v88 = vld.sshfl [vmem:[#allocation1 + $0x38] sm:$0xff pattern:$0x73625140]
    %v97 = vmul.f32 %v60, %v81
    %v98 = vmul.f32 %v61, %v82
    %v99 = vmul.f32 %v62, %v83
    %v100 = vmul.f32 %v63, %v84
    %v101 = vmul.f32 %v64, %v85
    %v102 = vmul.f32 %v65, %v86
    %v103 = vmul.f32 %v66, %v87
    %v104 = vmul.f32 %v67, %v88
    %v105 = vld [vmem:[#allocation7] sm:$0xff]
    %v107 = vperm.slane %v105, 0
    %v108 = vperm.slane %v105, 1
    %v109 = vperm.slane %v105, 2
    %v110 = vperm.slane %v105, 3
    %v111 = vperm.slane %v105, 4
    %v112 = vperm.slane %v105, 5
    %v113 = vperm.slane %v105, 6
    %v114 = vperm.slane %v105, 7
    %v123 = vadd.f32 %v97, %v107
    %v124 = vadd.f32 %v98, %v108
    %v125 = vadd.f32 %v99, %v109
    %v126 = vadd.f32 %v100, %v110
    %v127 = vadd.f32 %v101, %v111
    %v128 = vadd.f32 %v102, %v112
    %v129 = vadd.f32 %v103, %v113
    %v130 = vadd.f32 %v104, %v114
    %v139 = vrot.slane %v124, 6
    %v140 = vrot.slane %v125, 4
    %v141 = vrot.slane %v126, 2
    %v142 = vrot.slane %v128, 6
    %v143 = vrot.slane %v129, 4
    %v144 = vrot.slane %v130, 2
    %vm145 = vcmask 1041408
    %v146 = vsel %vm145, %v123, %v139
    %vm147 = vcmask 1045508
    %v148 = vsel %vm147, %v140, %v141
    %vm149 = vcmask 1043456
    %v150 = vsel %vm149, %v146, %v148
    %v151 = vsel %vm145, %v127, %v142
    %v152 = vsel %vm147, %v143, %v144
    %v153 = vsel %vm149, %v151, %v152
    %156 = vst [vmem:[#allocation8] sm:$0xff] %v150
    %157 = vst [vmem:[#allocation8 + $0x8] sm:$0xff] %v153
    // Predicated region
    $region26: #{tpu_custom_call.1} parent=1 // pred_check
      _
    $region27: #{tpu_custom_call.1} parent=1 // pred_check_branch
      %159 = sbr.rel (0) target = $region29
    $region28: #{tpu_custom_call.1} parent=1 // pred_region
      %161 = vsyncadd [#allocation4], 0
      %s163 = sshll.u32 [#allocation8], 4
      %s164 = int_to_ptr.vmem [resolvable:$true] %s163
      %s165 = sshll.u32 %s3, 4
      %s166 = int_to_ptr.hbm [resolvable:$true] %s165
      %168 = dma.vmem_to_hbm [thread:$0]  %s164, 256, %s166, [#allocation4]
    $region29: #{tpu_custom_call.1} parent=1 // pred_fallthru
      _
    // Predicated region
    $region30: #{tpu_custom_call.1} parent=1 // pred_check
      _
    $region31: #{tpu_custom_call.1} parent=1 // pred_check_branch
      %170 = sbr.rel (0) target = $region33
    $region32: #{tpu_custom_call.1} parent=1 // pred_region
      %172 = dma.done [#allocation4], 256
    $region33: #{tpu_custom_call.1} parent=1 // pred_fallthru
      _
    %173 = vsyncpa [#allocation3], 1
    %174 = vsyncpa [#allocation6], 1
    %175 = vsyncpa [#allocation4], 1

</llo_original>
